<compile_context>
chip_gen: v5e
topology: v5e:2x2
jax: 0.10.0
libtpu: 0.0.40
codegen_flags: <defaults>
</compile_context>

<pallas_src>
import functools

import jax
import jax.numpy as jnp
from jax.experimental import pallas as pl
from jax.experimental.pallas import tpu as pltpu

EPS = 1e-15  # kept for API parity; the softplus-form loss makes it unnecessary


# ----------------------------------------------------------------------------
# Pass 1: encoder over node tiles + running summary accumulator.
#   pos_z_tile = PReLU(x_tile @ W + b)
#   summary    = sigmoid((1/N) * sum_tiles sum_rows pos_z_tile)   (last tile)
# ----------------------------------------------------------------------------
def _encoder_summary_kernel(x_ref, w_ref, b_ref, alpha_ref,
                            pos_z_ref, summary_ref, sum_acc, *, inv_n):
    i = pl.program_id(0)

    @pl.when(i == 0)
    def _():
        sum_acc[...] = jnp.zeros_like(sum_acc)

    # encoder matmul on the MXU, f32 accumulate
    h = jnp.dot(x_ref[...], w_ref[...], preferred_element_type=jnp.float32)
    h = h + b_ref[...]                       # (1, H) broadcast over rows
    alpha = alpha_ref[0]                     # PReLU slope, SMEM scalar path
    z = jnp.where(h > 0, h, alpha * h)
    pos_z_ref[...] = z.astype(pos_z_ref.dtype)

    # per-tile running (1, H) accumulator for the mean readout
    sum_acc[...] += jnp.sum(z, axis=0, keepdims=True)

    @pl.when(i == pl.num_programs(0) - 1)
    def _():
        summary_ref[...] = jax.nn.sigmoid(sum_acc[...] * inv_n).astype(
            summary_ref.dtype)


# ----------------------------------------------------------------------------
# Pass 2: discriminator + DGI loss over node tiles.
#   t      = summary @ weight^T            (computed once, kept in VMEM scratch)
#   pos_v  = pos_z_tile @ t^T              (MXU matmul, (tile_n, 1))
#   loss   = mean( softplus(-pos_v) + softplus(pos_v) )
# neg_v is exactly a permutation of pos_v (row-wise encoder + row-permutation
# corruption), so the negative term needs no neg_z at all.
# ----------------------------------------------------------------------------
def _disc_loss_kernel(pos_z_ref, summary_ref, wd_ref,
                      loss_ref, t_scr, acc_scr, *, inv_n):
    i = pl.program_id(0)

    @pl.when(i == 0)
    def _():
        # t = (weight @ summary)^T = summary @ weight^T, computed ONCE
        t_scr[...] = jax.lax.dot_general(
            summary_ref[...], wd_ref[...],
            dimension_numbers=(((1,), (1,)), ((), ())),
            preferred_element_type=jnp.float32)              # (1, H)
        acc_scr[...] = jnp.zeros_like(acc_scr)

    # pos_v on the MXU: (tile_n, H) x (H, 1) -> (tile_n, 1)
    v = jax.lax.dot_general(
        pos_z_ref[...], t_scr[...],
        dimension_numbers=(((1,), (1,)), ((), ())),
        preferred_element_type=jnp.float32)

    # softplus(v) + softplus(-v) == |v| + 2*log1p(exp(-|v|))  (one exp, stable)
    a = jnp.abs(v)
    contrib = a + 2.0 * jnp.log1p(jnp.exp(-a))
    acc_scr[...] += jnp.sum(contrib, axis=0, keepdims=True)   # (1, 1)

    @pl.when(i == pl.num_programs(0) - 1)
    def _():
        loss_ref[...] = (acc_scr[...] * inv_n).astype(loss_ref.dtype)


# ----------------------------------------------------------------------------
# Wrapper: two streamed pallas_calls + XLA row-gather for neg_z.
# ----------------------------------------------------------------------------
def dgi_forward_and_loss(x, w_enc, b_enc, alpha, weight, perm, *, tile_n=128):
    """Returns ((pos_z, neg_z, summary, w1, w2), loss) — the module's forward
    outputs plus the DGI loss."""
    n, f = x.shape
    hid = w_enc.shape[1]
    # For realistic graphs aim for 512–1024-row tiles; fall back to one block
    # when N is not a multiple of the tile.
    if n % tile_n != 0:
        tile_n = n
    nt = n // tile_n
    inv_n = 1.0 / float(n)

    cparams = pltpu.CompilerParams(
        dimension_semantics=("arbitrary",),          # accumulator across tiles
        vmem_limit_bytes=32 * 1024 * 1024,           # explicit: v5e/v7x budgets
    )

    # ---- pass 1: encoder + summary -----------------------------------------
    pos_z, summary = pl.pallas_call(
        functools.partial(_encoder_summary_kernel, inv_n=inv_n),
        out_shape=(
            jax.ShapeDtypeStruct((n, hid), jnp.float32),   # pos_z
            jax.ShapeDtypeStruct((1, hid), jnp.float32),   # summary
        ),
        grid=(nt,),
        in_specs=[
            pl.BlockSpec((tile_n, f), lambda i: (i, 0)),            # x tile
            pl.BlockSpec((f, hid), lambda i: (0, 0)),               # W_enc
            pl.BlockSpec((1, hid), lambda i: (0, 0)),               # b_enc
            pl.BlockSpec(memory_space=pltpu.MemorySpace.SMEM),      # alpha
        ],
        out_specs=(
            pl.BlockSpec((tile_n, hid), lambda i: (i, 0)),
            pl.BlockSpec((1, hid), lambda i: (0, 0)),
        ),
        scratch_shapes=[pltpu.VMEM((1, hid), jnp.float32)],
        compiler_params=cparams,
    )(x, w_enc, b_enc, alpha)

    # ---- pass 2: discriminator + loss (single scalar output) ---------------
    loss2d = pl.pallas_call(
        functools.partial(_disc_loss_kernel, inv_n=inv_n),
        out_shape=jax.ShapeDtypeStruct((1, 1), jnp.float32),
        grid=(nt,),
        in_specs=[
            pl.BlockSpec((tile_n, hid), lambda i: (i, 0)),          # pos_z tile
            pl.BlockSpec((1, hid), lambda i: (0, 0)),               # summary
            pl.BlockSpec((hid, hid), lambda i: (0, 0)),             # weight
        ],
        out_specs=pl.BlockSpec((1, 1), lambda i: (0, 0)),
        scratch_shapes=[pltpu.VMEM((1, hid), jnp.float32),          # t
                        pltpu.VMEM((1, 1), jnp.float32)],           # loss acc
        compiler_params=cparams,
    )(pos_z, summary, weight)

    loss = loss2d[0, 0]

    # corruption = row permutation and the encoder is row-wise, therefore
    # neg_z = PReLU(x[perm] @ W + b) == pos_z[perm].  Cheap XLA gather on the
    # already-materialized pos_z (no second encode, no O(N^2) one-hot matmul).
    neg_z = jnp.take(pos_z, perm, axis=0)

    # The WNN encoder also returns two weight tensors; pass them through.
    return (pos_z, neg_z, summary, w_enc, b_enc), loss


dgi_forward_and_loss_jit = jax.jit(dgi_forward_and_loss)


# ----------------------------------------------------------------------------
if __name__ == "__main__":
    # Lane-dense small demo shapes: nodes, input features, hidden_channels.
    # tile_n=128 -> 2 node tiles per pass, exercising the streamed accumulators.
    N, F, H = 256, 128, 128

    key = jax.random.PRNGKey(0)
    k_x, k_w, k_b, k_disc, k_perm = jax.random.split(key, 5)

    x = jax.random.normal(k_x, (N, F), dtype=jnp.float32)

    # Deterministic parameter init (uniform(size, tensor) semantics: +-1/sqrt(size)).
    bound_enc = 1.0 / jnp.sqrt(F)
    w_enc = jax.random.uniform(k_w, (F, H), jnp.float32, -bound_enc, bound_enc)
    b_enc = jax.random.uniform(k_b, (1, H), jnp.float32, -bound_enc, bound_enc)
    alpha = jnp.full((1,), 0.25, dtype=jnp.float32)            # PReLU slope (SMEM)

    bound_w = 1.0 / jnp.sqrt(H)
    weight = jax.random.uniform(k_disc, (H, H), jnp.float32, -bound_w, bound_w)

    perm = jax.random.permutation(k_perm, N)                   # corruption perm

    (pos_z, neg_z, summary, w1, w2), loss = dgi_forward_and_loss_jit(
        x, w_enc, b_enc, alpha, weight, perm)
    jax.block_until_ready((pos_z, neg_z, summary, w1, w2, loss))

    # ---- plain-JAX reference for a correctness sanity check ----------------
    h_ref = x @ w_enc + b_enc
    pos_ref = jnp.where(h_ref > 0, h_ref, 0.25 * h_ref)
    neg_ref = pos_ref[perm]                      # == PReLU(x[perm] @ W + b)
    s_ref = jax.nn.sigmoid(pos_ref.mean(axis=0, keepdims=True))
    t_ref = s_ref @ weight.T
    pv = jnp.sum(pos_ref * t_ref, axis=1)
    nv = jnp.sum(neg_ref * t_ref, axis=1)
    loss_ref = jnp.mean(jax.nn.softplus(-pv)) + jnp.mean(jax.nn.softplus(nv))

    assert pos_z.shape == (N, H) and neg_z.shape == (N, H)
    assert summary.shape == (1, H)
    assert jnp.allclose(pos_z, pos_ref, atol=1e-4, rtol=1e-4)
    assert jnp.allclose(neg_z, neg_ref, atol=1e-4, rtol=1e-4)
    assert jnp.allclose(summary, s_ref, atol=1e-4, rtol=1e-4)
    assert jnp.allclose(loss, loss_ref, atol=1e-4, rtol=1e-4)
    assert jnp.isfinite(loss)
    print("KERNEL_OK")
</pallas_src>

<mosaic_0001>
module attributes {stable_mosaic.version = 11 : i64} {
  func.func @_disc_loss_kernel(%arg0: i32, %arg1: memref<128x128xf32, #tpu.memory_space<vmem>>, %arg2: memref<1x128xf32, #tpu.memory_space<vmem>>, %arg3: memref<128x128xf32, #tpu.memory_space<vmem>>, %arg4: memref<1x1xf32, #tpu.memory_space<vmem>>, %arg5: memref<1x128xf32, #tpu.memory_space<vmem>>, %arg6: memref<1x1xf32, #tpu.memory_space<vmem>>) attributes {dimension_semantics = [#tpu.dimension_semantics<arbitrary>], iteration_bounds = array<i64: 2>, scalar_prefetch = 0 : i64, scratch_operands = 2 : i64, tpu.core_type = #tpu.core_type<tc>, window_params = [{transform_indices = @transform_0, window_bounds = array<i64: 128, 128>}, {pipeline_mode = #tpu.pipeline_mode<synchronous>, transform_indices = @transform_1, window_bounds = array<i64: 1, 128>}, {pipeline_mode = #tpu.pipeline_mode<synchronous>, transform_indices = @transform_2, window_bounds = array<i64: 128, 128>}, {pipeline_mode = #tpu.pipeline_mode<synchronous>, transform_indices = @transform_3, window_bounds = array<i64: 1, 1>}]} {
    %c0_i32 = arith.constant 0 : i32
    %0 = arith.cmpi eq, %arg0, %c0_i32 : i32
    %1 = arith.extui %0 : i1 to i32
    %c0_i32_0 = arith.constant 0 : i32
    %2 = arith.cmpi ne, %1, %c0_i32_0 : i32
    scf.if %2 {
      %c0_12 = arith.constant 0 : index
      %c0_13 = arith.constant 0 : index
      %22 = vector.load %arg2[%c0_12, %c0_13] : memref<1x128xf32, #tpu.memory_space<vmem>>, vector<1x128xf32>
      %c0_14 = arith.constant 0 : index
      %c0_15 = arith.constant 0 : index
      %23 = vector.load %arg3[%c0_14, %c0_15] : memref<128x128xf32, #tpu.memory_space<vmem>>, vector<128x128xf32>
      %cst_16 = arith.constant dense<0.000000e+00> : vector<1x128xf32>
      %24 = tpu.matmul %22, %23, %cst_16 {dimension_numbers = #tpu.dot_dimension_numbers<[1], [1], [0], [0], [0, 0, 1, 0], [], []>} : vector<1x128xf32>, vector<128x128xf32>, vector<1x128xf32> -> vector<1x128xf32>
      %c0_17 = arith.constant 0 : index
      %c0_18 = arith.constant 0 : index
      %25 = vector.load %arg5[%c0_17, %c0_18] : memref<1x128xf32, #tpu.memory_space<vmem>>, vector<1x128xf32>
      tpu.vector_store %arg5[%c0_17, %c0_18], %24 {strides = array<i32>} : memref<1x128xf32, #tpu.memory_space<vmem>>, vector<1x128xf32>,
      %cst_19 = arith.constant 0.000000e+00 : f32
      %26 = vector.broadcast %cst_19 : f32 to vector<1x1xf32>
      %c0_20 = arith.constant 0 : index
      %c0_21 = arith.constant 0 : index
      %27 = vector.load %arg6[%c0_20, %c0_21] : memref<1x1xf32, #tpu.memory_space<vmem>>, vector<1x1xf32>
      tpu.vector_store %arg6[%c0_20, %c0_21], %26 {strides = array<i32>} : memref<1x1xf32, #tpu.memory_space<vmem>>, vector<1x1xf32>,
    } else {
    }
    %c0 = arith.constant 0 : index
    %c0_1 = arith.constant 0 : index
    %3 = vector.load %arg1[%c0, %c0_1] : memref<128x128xf32, #tpu.memory_space<vmem>>, vector<128x128xf32>
    %c0_2 = arith.constant 0 : index
    %c0_3 = arith.constant 0 : index
    %4 = vector.load %arg5[%c0_2, %c0_3] : memref<1x128xf32, #tpu.memory_space<vmem>>, vector<1x128xf32>
    %cst = arith.constant dense<0.000000e+00> : vector<128x1xf32>
    %5 = tpu.matmul %3, %4, %cst {dimension_numbers = #tpu.dot_dimension_numbers<[1], [1], [0], [0], [0, 0, 1, 0], [], []>} : vector<128x128xf32>, vector<1x128xf32>, vector<128x1xf32> -> vector<128x1xf32>
    %6 = math.absf %5 : vector<128x1xf32>
    %cst_4 = arith.constant 0.000000e+00 : f32
    %7 = vector.broadcast %cst_4 : f32 to vector<128x1xf32>
    %8 = arith.subf %7, %6 : vector<128x1xf32>
    %9 = math.exp %8 : vector<128x1xf32>
    %10 = math.log1p %9 : vector<128x1xf32>
    %cst_5 = arith.constant 2.000000e+00 : f32
    %11 = vector.broadcast %cst_5 : f32 to vector<128x1xf32>
    %12 = arith.mulf %11, %10 : vector<128x1xf32>
    %13 = arith.addf %6, %12 : vector<128x1xf32>
    %c0_6 = arith.constant 0 : index
    %c0_7 = arith.constant 0 : index
    %14 = vector.load %arg6[%c0_6, %c0_7] : memref<1x1xf32, #tpu.memory_space<vmem>>, vector<1x1xf32>
    %cst_8 = arith.constant dense<0.000000e+00> : vector<1xf32>
    %15 = vector.multi_reduction <add>, %13, %cst_8 [0] : vector<128x1xf32> to vector<1xf32>
    %16 = vector.shape_cast %15 : vector<1xf32> to vector<1x1xf32>
    %17 = arith.addf %14, %16 : vector<1x1xf32>
    %c0_9 = arith.constant 0 : index
    %c0_10 = arith.constant 0 : index
    %18 = vector.load %arg6[%c0_9, %c0_10] : memref<1x1xf32, #tpu.memory_space<vmem>>, vector<1x1xf32>
    tpu.vector_store %arg6[%c0_9, %c0_10], %17 {strides = array<i32>} : memref<1x1xf32, #tpu.memory_space<vmem>>, vector<1x1xf32>,
    %c1_i32 = arith.constant 1 : i32
    %19 = arith.cmpi eq, %arg0, %c1_i32 : i32
    %20 = arith.extui %19 : i1 to i32
    %c0_i32_11 = arith.constant 0 : i32
    %21 = arith.cmpi ne, %20, %c0_i32_11 : i32
    scf.if %21 {
      %c0_12 = arith.constant 0 : index
      %c0_13 = arith.constant 0 : index
      %22 = vector.load %arg6[%c0_12, %c0_13] : memref<1x1xf32, #tpu.memory_space<vmem>>, vector<1x1xf32>
      %cst_14 = arith.constant 3.906250e-03 : f32
      %23 = vector.broadcast %cst_14 : f32 to vector<1x1xf32>
      %24 = arith.mulf %22, %23 : vector<1x1xf32>
      %c0_15 = arith.constant 0 : index
      %c0_16 = arith.constant 0 : index
      %25 = vector.load %arg4[%c0_15, %c0_16] : memref<1x1xf32, #tpu.memory_space<vmem>>, vector<1x1xf32>
      tpu.vector_store %arg4[%c0_15, %c0_16], %24 {strides = array<i32>} : memref<1x1xf32, #tpu.memory_space<vmem>>, vector<1x1xf32>,
    } else {
    }
    return
  }
  func.func @transform_0(%arg0: i32) -> (i32, i32) {
    %c0_i32 = arith.constant 0 : i32
    %c0_i32_0 = arith.constant 0 : i32
    return %arg0, %c0_i32 : i32, i32
  }
  func.func @transform_1(%arg0: i32) -> (i32, i32) {
    %c0_i32 = arith.constant 0 : i32
    %c0_i32_0 = arith.constant 0 : i32
    %c0_i32_1 = arith.constant 0 : i32
    return %c0_i32, %c0_i32_0 : i32, i32
  }
  func.func @transform_2(%arg0: i32) -> (i32, i32) {
    %c0_i32 = arith.constant 0 : i32
    %c0_i32_0 = arith.constant 0 : i32
    %c0_i32_1 = arith.constant 0 : i32
    return %c0_i32, %c0_i32_0 : i32, i32
  }
  func.func @transform_3(%arg0: i32) -> (i32, i32) {
    %c0_i32 = arith.constant 0 : i32
    %c0_i32_0 = arith.constant 0 : i32
    %c0_i32_1 = arith.constant 0 : i32
    return %c0_i32, %c0_i32_0 : i32, i32
  }
}

module attributes {stable_mosaic.version = 11 : i64} {
  func.func @_encoder_summary_kernel(%arg0: i32, %arg1: memref<128x128xf32, #tpu.memory_space<vmem>>, %arg2: memref<128x128xf32, #tpu.memory_space<vmem>>, %arg3: memref<1x128xf32, #tpu.memory_space<vmem>>, %arg4: memref<1xf32, #tpu.memory_space<smem>>, %arg5: memref<128x128xf32, #tpu.memory_space<vmem>>, %arg6: memref<1x128xf32, #tpu.memory_space<vmem>>, %arg7: memref<1x128xf32, #tpu.memory_space<vmem>>) attributes {dimension_semantics = [#tpu.dimension_semantics<arbitrary>], iteration_bounds = array<i64: 2>, scalar_prefetch = 0 : i64, scratch_operands = 1 : i64, tpu.core_type = #tpu.core_type<tc>, window_params = [{transform_indices = @transform_0, window_bounds = array<i64: 128, 128>}, {pipeline_mode = #tpu.pipeline_mode<synchronous>, transform_indices = @transform_1, window_bounds = array<i64: 128, 128>}, {pipeline_mode = #tpu.pipeline_mode<synchronous>, transform_indices = @transform_2, window_bounds = array<i64: 1, 128>}, {transform_indices = @transform_3, window_bounds = array<i64: 1>}, {transform_indices = @transform_4, window_bounds = array<i64: 128, 128>}, {pipeline_mode = #tpu.pipeline_mode<synchronous>, transform_indices = @transform_5, window_bounds = array<i64: 1, 128>}]} {
    %c0_i32 = arith.constant 0 : i32
    %0 = arith.cmpi eq, %arg0, %c0_i32 : i32
    %1 = arith.extui %0 : i1 to i32
    %c0_i32_0 = arith.constant 0 : i32
    %2 = arith.cmpi ne, %1, %c0_i32_0 : i32
    scf.if %2 {
      %cst_16 = arith.constant 0.000000e+00 : f32
      %24 = vector.broadcast %cst_16 : f32 to vector<1x128xf32>
      %c0_17 = arith.constant 0 : index
      %c0_18 = arith.constant 0 : index
      %25 = vector.load %arg7[%c0_17, %c0_18] : memref<1x128xf32, #tpu.memory_space<vmem>>, vector<1x128xf32>
      tpu.vector_store %arg7[%c0_17, %c0_18], %24 {strides = array<i32>} : memref<1x128xf32, #tpu.memory_space<vmem>>, vector<1x128xf32>,
    } else {
    }
    %c0 = arith.constant 0 : index
    %c0_1 = arith.constant 0 : index
    %3 = vector.load %arg1[%c0, %c0_1] : memref<128x128xf32, #tpu.memory_space<vmem>>, vector<128x128xf32>
    %c0_2 = arith.constant 0 : index
    %c0_3 = arith.constant 0 : index
    %4 = vector.load %arg2[%c0_2, %c0_3] : memref<128x128xf32, #tpu.memory_space<vmem>>, vector<128x128xf32>
    %cst = arith.constant dense<0.000000e+00> : vector<128x128xf32>
    %5 = tpu.matmul %3, %4, %cst {dimension_numbers = #tpu.dot_dimension_numbers<[1], [0], [0], [1], [0, 0, 1, 1], [], []>} : vector<128x128xf32>, vector<128x128xf32>, vector<128x128xf32> -> vector<128x128xf32>
    %c0_4 = arith.constant 0 : index
    %c0_5 = arith.constant 0 : index
    %6 = vector.load %arg3[%c0_4, %c0_5] : memref<1x128xf32, #tpu.memory_space<vmem>>, vector<1x128xf32>
    %7 = vector.broadcast %6 : vector<1x128xf32> to vector<128x128xf32>
    %8 = arith.addf %5, %7 : vector<128x128xf32>
    %c0_6 = arith.constant 0 : index
    %9 = memref.load %arg4[%c0_6] : memref<1xf32, #tpu.memory_space<smem>>
    %cst_7 = arith.constant 0.000000e+00 : f32
    %10 = vector.broadcast %cst_7 : f32 to vector<128x128xf32>
    %11 = arith.cmpf ogt, %8, %10 : vector<128x128xf32>
    %12 = vector.broadcast %9 : f32 to vector<128x128xf32>
    %13 = arith.mulf %12, %8 : vector<128x128xf32>
    %14 = arith.select %11, %8, %13 : vector<128x128xi1>, vector<128x128xf32>
    %c0_8 = arith.constant 0 : index
    %c0_9 = arith.constant 0 : index
    %15 = vector.load %arg5[%c0_8, %c0_9] : memref<128x128xf32, #tpu.memory_space<vmem>>, vector<128x128xf32>
    tpu.vector_store %arg5[%c0_8, %c0_9], %14 {strides = array<i32>} : memref<128x128xf32, #tpu.memory_space<vmem>>, vector<128x128xf32>,
    %c0_10 = arith.constant 0 : index
    %c0_11 = arith.constant 0 : index
    %16 = vector.load %arg7[%c0_10, %c0_11] : memref<1x128xf32, #tpu.memory_space<vmem>>, vector<1x128xf32>
    %cst_12 = arith.constant dense<0.000000e+00> : vector<128xf32>
    %17 = vector.multi_reduction <add>, %14, %cst_12 [0] : vector<128x128xf32> to vector<128xf32>
    %18 = vector.shape_cast %17 : vector<128xf32> to vector<1x128xf32>
    %19 = arith.addf %16, %18 : vector<1x128xf32>
    %c0_13 = arith.constant 0 : index
    %c0_14 = arith.constant 0 : index
    %20 = vector.load %arg7[%c0_13, %c0_14] : memref<1x128xf32, #tpu.memory_space<vmem>>, vector<1x128xf32>
    tpu.vector_store %arg7[%c0_13, %c0_14], %19 {strides = array<i32>} : memref<1x128xf32, #tpu.memory_space<vmem>>, vector<1x128xf32>,
    %c1_i32 = arith.constant 1 : i32
    %21 = arith.cmpi eq, %arg0, %c1_i32 : i32
    %22 = arith.extui %21 : i1 to i32
    %c0_i32_15 = arith.constant 0 : i32
    %23 = arith.cmpi ne, %22, %c0_i32_15 : i32
    scf.if %23 {
      %c0_16 = arith.constant 0 : index
      %c0_17 = arith.constant 0 : index
      %24 = vector.load %arg7[%c0_16, %c0_17] : memref<1x128xf32, #tpu.memory_space<vmem>>, vector<1x128xf32>
      %cst_18 = arith.constant 3.906250e-03 : f32
      %25 = vector.broadcast %cst_18 : f32 to vector<1x128xf32>
      %26 = arith.mulf %24, %25 : vector<1x128xf32>
      %27 = arith.negf %26 : vector<1x128xf32>
      %28 = math.exp %27 : vector<1x128xf32>
      %cst_19 = arith.constant 1.000000e+00 : f32
      %29 = vector.broadcast %cst_19 : f32 to vector<1x128xf32>
      %30 = arith.addf %29, %28 : vector<1x128xf32>
      %31 = arith.divf %29, %30 : vector<1x128xf32>
      %c0_20 = arith.constant 0 : index
      %c0_21 = arith.constant 0 : index
      %32 = vector.load %arg6[%c0_20, %c0_21] : memref<1x128xf32, #tpu.memory_space<vmem>>, vector<1x128xf32>
      tpu.vector_store %arg6[%c0_20, %c0_21], %31 {strides = array<i32>} : memref<1x128xf32, #tpu.memory_space<vmem>>, vector<1x128xf32>,
    } else {
    }
    return
  }
  func.func @transform_0(%arg0: i32) -> (i32, i32) {
    %c0_i32 = arith.constant 0 : i32
    %c0_i32_0 = arith.constant 0 : i32
    return %arg0, %c0_i32 : i32, i32
  }
  func.func @transform_1(%arg0: i32) -> (i32, i32) {
    %c0_i32 = arith.constant 0 : i32
    %c0_i32_0 = arith.constant 0 : i32
    %c0_i32_1 = arith.constant 0 : i32
    return %c0_i32, %c0_i32_0 : i32, i32
  }
  func.func @transform_2(%arg0: i32) -> (i32, i32) {
    %c0_i32 = arith.constant 0 : i32
    %c0_i32_0 = arith.constant 0 : i32
    %c0_i32_1 = arith.constant 0 : i32
    return %c0_i32, %c0_i32_0 : i32, i32
  }
  func.func @transform_3(%arg0: i32) -> i32 {
    %c0_i32 = arith.constant 0 : i32
    %c0_i32_0 = arith.constant 0 : i32
    return %c0_i32 : i32
  }
  func.func @transform_4(%arg0: i32) -> (i32, i32) {
    %c0_i32 = arith.constant 0 : i32
    %c0_i32_0 = arith.constant 0 : i32
    return %arg0, %c0_i32 : i32, i32
  }
  func.func @transform_5(%arg0: i32) -> (i32, i32) {
    %c0_i32 = arith.constant 0 : i32
    %c0_i32_0 = arith.constant 0 : i32
    %c0_i32_1 = arith.constant 0 : i32
    return %c0_i32, %c0_i32_0 : i32, i32
  }
}

</mosaic_0001>

<llo_original>
// kernel: dgi_forward_and_loss.2
$region0: #{dgi_forward_and_loss.2}
  #allocation0 [shape = 'u32[]', space=smem, size = 0x4, offset = 0x4, fixed_abs, tag = 'smem constant byte address 0x4 - core index']
  #allocation1 [shape = 'u32[72,128]{1,0:T(1,128)}', space=vmem, size = 0x9000, scoped, tag = 'internal scratch']
  #allocation2 [shape = 'f32[1,128]{1,0:T(1,128)}', space=vmem, size = 0x200, scoped, tag = 'scratch operand']
  #allocation3 [shape = 'f32[1]{0:T(128)S(6)}', space=smem, size = 0x200, scoped, tag = 'scoped memory for dgi_forward_and_loss.2']
  %s0 = inlined_call_operand.hbm [shape: f32[256,128], index: 0, kind: input, shape index: {}]
  %s1 = inlined_call_operand.hbm [shape: f32[128,128], index: 1, kind: input, shape index: {}]
  %s2 = inlined_call_operand.vmem [shape: f32[1,128], index: 2, kind: input, shape index: {}]
  %s3 = inlined_call_operand.<no memory space> [shape: f32[1], index: 3, kind: input, shape index: {}]
  %s4 = inlined_call_operand.vmem [shape: f32[256,128], index: 4, kind: output, shape index: {0}]
  %s5 = inlined_call_operand.vmem [shape: f32[1,128], index: 5, kind: output, shape index: {1}]
  %6 = xla_tuple %s4, %s5
  %s7 = sld [smem:[#allocation0]]
  $region73: #{dgi_forward_and_loss.2} parent=0
    _
  %s9 = ssub.s32 1, %s7
  %s10 = scalar_select 0, %s9, %s7
  %11 = sst [smem:[#allocation3]] %s3
  $region1: #{dgi_forward_and_loss.2} parent=0
    #allocation4 [shape = 'u8[131072]{0}', space=vmem, size = 0x20000, scoped, tag = 'input window, operand 0']
    #allocation5 [shape = 's32[2]{0}', space=sflag, size = 0x8, scoped, tag = 'scoped memory for dgi_forward_and_loss.2']
    #allocation6 [shape = 'u8[65536]{0}', space=vmem, size = 0x10000, scoped, tag = 'input window, operand 1, single buffered']
    #allocation7 [shape = 's32[1]{0}', space=sflag, size = 0x4, scoped, tag = 'scoped memory for dgi_forward_and_loss.2']
    %12 = vsyncpa [#allocation5], 0
    %s13 = scalar_lea.sflag [#allocation5], 1
    %14 = vsyncpa %s13, 0
    %15 = vsyncpa [#allocation7], 0
    loop: start=0, step=1, limit=4
    $region2: #{dgi_forward_and_loss.2} parent=1 // loop_pre_header
      _
    $region3: #{dgi_forward_and_loss.2} parent=1 // loop_header
      %s17 = sphi 0, %s21
      %p18 = scmp.ge.s32.totalorder %s17, 4
      %s27 = sphi 0, %s29
      %s30 = sphi 0, %s27
      %s31 = sphi 0, %s30
      %s47 = sphi 0, %s31
      %s51 = sphi 0, %s51
      %s53 = sphi 0, %s51
      %s54 = sphi 0, %s53
      %s68 = sphi 0, %s54
      %s72 = sphi 0, %s72
      %s74 = sphi 0, %s72
      %s75 = sphi 0, %s74
      %s89 = sphi 0, %s75
      %s93 = sphi 0, %s93
      %s95 = sphi 0, %s93
      %s96 = sphi 0, %s95
      %s110 = sphi 0, %s96
      %s116 = sphi 0, %s118
      %s119 = sphi 0, %s116
      %s120 = sphi 0, %s119
      %s136 = sphi 0, %s120
      %s140 = sphi 0, %s140
      %s142 = sphi 0, %s140
      %s143 = sphi 0, %s142
      %s157 = sphi 0, %s143
    $region4: #{dgi_forward_and_loss.2} parent=1 // loop_header_branch
      %20 = sbr.rel (%p18) target = $region8
    $region5: #{dgi_forward_and_loss.2} parent=1 // loop_body
      %s22 = ssub.s32 %s17, 1
      %s23 = ssub.s32 %s17, 2
      %s24 = sadd.s32 %s17, 1
      %s25 = ssub.s32 %s17, %s24
      %p26 = scmp.eq.s32.totalorder %s25, 0
      %s28 = sadd.s32 %s27, 1
      %s29 = scalar_select %p26, %s27, %s28
      %p32 = pneg %p26
      %p33 = scmp.eq.s32.totalorder %s17, 1
      %p34 = por %p32, %p33
      %p35 = scmp.ne.s32.totalorder %s27, %s30
      %p36 = scmp.eq.s32.totalorder %s17, 0
      %p37 = por %p35, %p36
      %p38 = scmp.ne.s32.totalorder %s27, %s30
      %p39 = scmp.eq.s32.totalorder %s22, 1
      %p40 = por %p38, %p39
      %p41 = scmp.ne.s32.totalorder %s30, %s31
      %p42 = scmp.eq.s32.totalorder %s22, 0
      %p43 = por %p41, %p42
      %p44 = scmp.ne.s32.totalorder %s30, %s31
      %p45 = scmp.eq.s32.totalorder %s23, 1
      %p46 = por %p44, %p45
      %p48 = scmp.ne.s32.totalorder %s31, %s47
      %p49 = scmp.eq.s32.totalorder %s23, 0
      %p50 = por %p48, %p49
      %s52 = sadd.s32 %s51, 1
      %p55 = scmp.eq.s32.totalorder %s17, 1
      %p56 = scmp.ne.s32.totalorder %s51, %s53
      %p57 = scmp.eq.s32.totalorder %s17, 0
      %p58 = por %p56, %p57
      %p59 = scmp.ne.s32.totalorder %s51, %s53
      %p60 = scmp.eq.s32.totalorder %s22, 1
      %p61 = por %p59, %p60
      %p62 = scmp.ne.s32.totalorder %s53, %s54
      %p63 = scmp.eq.s32.totalorder %s22, 0
      %p64 = por %p62, %p63
      %p65 = scmp.ne.s32.totalorder %s53, %s54
      %p66 = scmp.eq.s32.totalorder %s23, 1
      %p67 = por %p65, %p66
      %p69 = scmp.ne.s32.totalorder %s54, %s68
      %p70 = scmp.eq.s32.totalorder %s23, 0
      %p71 = por %p69, %p70
      %s73 = sadd.s32 %s72, 1
      %p76 = scmp.eq.s32.totalorder %s17, 1
      %p77 = scmp.ne.s32.totalorder %s72, %s74
      %p78 = scmp.eq.s32.totalorder %s17, 0
      %p79 = por %p77, %p78
      %p80 = scmp.ne.s32.totalorder %s72, %s74
      %p81 = scmp.eq.s32.totalorder %s22, 1
      %p82 = por %p80, %p81
      %p83 = scmp.ne.s32.totalorder %s74, %s75
      %p84 = scmp.eq.s32.totalorder %s22, 0
      %p85 = por %p83, %p84
      %p86 = scmp.ne.s32.totalorder %s74, %s75
      %p87 = scmp.eq.s32.totalorder %s23, 1
      %p88 = por %p86, %p87
      %p90 = scmp.ne.s32.totalorder %s75, %s89
      %p91 = scmp.eq.s32.totalorder %s23, 0
      %p92 = por %p90, %p91
      %s94 = sadd.s32 %s93, 1
      %p97 = scmp.eq.s32.totalorder %s17, 1
      %p98 = scmp.ne.s32.totalorder %s93, %s95
      %p99 = scmp.eq.s32.totalorder %s17, 0
      %p100 = por %p98, %p99
      %p101 = scmp.ne.s32.totalorder %s93, %s95
      %p102 = scmp.eq.s32.totalorder %s22, 1
      %p103 = por %p101, %p102
      %p104 = scmp.ne.s32.totalorder %s95, %s96
      %p105 = scmp.eq.s32.totalorder %s22, 0
      %p106 = por %p104, %p105
      %p107 = scmp.ne.s32.totalorder %s95, %s96
      %p108 = scmp.eq.s32.totalorder %s23, 1
      %p109 = por %p107, %p108
      %p111 = scmp.ne.s32.totalorder %s96, %s110
      %p112 = scmp.eq.s32.totalorder %s23, 0
      %p113 = por %p111, %p112
      %s114 = ssub.s32 %s17, %s24
      %p115 = scmp.eq.s32.totalorder %s114, 0
      %s117 = sadd.s32 %s116, 1
      %s118 = scalar_select %p115, %s116, %s117
      %p121 = pneg %p115
      %p122 = scmp.eq.s32.totalorder %s17, 1
      %p123 = por %p121, %p122
      %p124 = scmp.ne.s32.totalorder %s116, %s119
      %p125 = scmp.eq.s32.totalorder %s17, 0
      %p126 = por %p124, %p125
      %p127 = scmp.ne.s32.totalorder %s116, %s119
      %p128 = scmp.eq.s32.totalorder %s22, 1
      %p129 = por %p127, %p128
      %p130 = scmp.ne.s32.totalorder %s119, %s120
      %p131 = scmp.eq.s32.totalorder %s22, 0
      %p132 = por %p130, %p131
      %p133 = scmp.ne.s32.totalorder %s119, %s120
      %p134 = scmp.eq.s32.totalorder %s23, 1
      %p135 = por %p133, %p134
      %p137 = scmp.ne.s32.totalorder %s120, %s136
      %p138 = scmp.eq.s32.totalorder %s23, 0
      %p139 = por %p137, %p138
      %s141 = sadd.s32 %s140, 1
      %p144 = scmp.eq.s32.totalorder %s17, 1
      %p145 = scmp.ne.s32.totalorder %s140, %s142
      %p146 = scmp.eq.s32.totalorder %s17, 0
      %p147 = por %p145, %p146
      %p148 = scmp.ne.s32.totalorder %s140, %s142
      %p149 = scmp.eq.s32.totalorder %s22, 1
      %p150 = por %p148, %p149
      %p151 = scmp.ne.s32.totalorder %s142, %s143
      %p152 = scmp.eq.s32.totalorder %s22, 0
      %p153 = por %p151, %p152
      %p154 = scmp.ne.s32.totalorder %s142, %s143
      %p155 = scmp.eq.s32.totalorder %s23, 1
      %p156 = por %p154, %p155
      %p158 = scmp.ne.s32.totalorder %s143, %s157
      %p159 = scmp.eq.s32.totalorder %s23, 0
      %p160 = por %p158, %p159
      %p161 = scmp.le.s32.totalorder 1, %s17
      %p162 = scmp.lt.s32.totalorder %s17, 3
      %p163 = pnand %p161, %p162
      %p164 = pneg %p163
      // Predicated region
      $region9: #{dgi_forward_and_loss.2} parent=5 // pred_check
        _
      $region10: #{dgi_forward_and_loss.2} parent=5 // pred_check_branch
        %166 = sbr.rel (%p163) target = $region12
      $region11: #{dgi_forward_and_loss.2} parent=5 // pred_region
        %s167 = ssub.s32 %s17, 1
        // Predicated region
        $region13: #{dgi_forward_and_loss.2} parent=11 // pred_check
          %p168 = pneg %p64
        $region14: #{dgi_forward_and_loss.2} parent=11 // pred_check_branch
          %170 = sbr.rel (%p168) target = $region16
        $region15: #{dgi_forward_and_loss.2} parent=11 // pred_region
          %172 = vsyncadd [#allocation7], 0
          %s173 = sshll.u32 %s1, 4
          %s174 = int_to_ptr.hbm [resolvable:$true] %s173
          %s175 = sshll.u32 [#allocation6], 4
          %s176 = int_to_ptr.vmem [resolvable:$true] %s175
          %181 = dma.hbm_to_vmem [thread:$0]  %s174, 2048, %s176, [#allocation7], 128, 128, 8
        $region16: #{dgi_forward_and_loss.2} parent=11 // pred_fallthru
          _
        // Predicated region
        $region17: #{dgi_forward_and_loss.2} parent=11 // pred_check
          %p182 = pneg %p85
        $region18: #{dgi_forward_and_loss.2} parent=11 // pred_check_branch
          %184 = sbr.rel (%p182) target = $region20
        $region19: #{dgi_forward_and_loss.2} parent=11 // pred_region
          _
        $region20: #{dgi_forward_and_loss.2} parent=11 // pred_fallthru
          _
        // Predicated region
        $region21: #{dgi_forward_and_loss.2} parent=11 // pred_check
          %p185 = pneg %p106
        $region22: #{dgi_forward_and_loss.2} parent=11 // pred_check_branch
          %187 = sbr.rel (%p185) target = $region24
        $region23: #{dgi_forward_and_loss.2} parent=11 // pred_region
          _
        $region24: #{dgi_forward_and_loss.2} parent=11 // pred_fallthru
          _
      $region12: #{dgi_forward_and_loss.2} parent=5 // pred_fallthru
        _
      %p188 = scmp.lt.s32.totalorder %s17, 2
      // Predicated region
      $region25: #{dgi_forward_and_loss.2} parent=5 // pred_check
        %p189 = pneg %p188
      $region26: #{dgi_forward_and_loss.2} parent=5 // pred_check_branch
        %191 = sbr.rel (%p189) target = $region28
      $region27: #{dgi_forward_and_loss.2} parent=5 // pred_region
        // Predicated region
        $region29: #{dgi_forward_and_loss.2} parent=27 // pred_check
          %p192 = pneg %p37
        $region30: #{dgi_forward_and_loss.2} parent=27 // pred_check_branch
          %194 = sbr.rel (%p192) target = $region32
        $region31: #{dgi_forward_and_loss.2} parent=27 // pred_region
          %s195 = sand.u32 %s27, 1
          %s196 = scalar_lea.sflag [#allocation5], %s195
          %s197 = sand.u32 %s27, 1
          %s198 = smul.addr %s197, 128
          %s199 = scalar_lea.vmem [#allocation4], %s198
          %s200 = smul.u32 16, %s17
          %202 = vsyncadd %s196, 0
          %s203 = smul.addr %s200, 8
          %s204 = scalar_lea.hbm %s0, %s203
          %s205 = sshll.u32 %s204, 4
          %s206 = int_to_ptr.hbm [resolvable:$true] %s205
          %s207 = sshll.u32 %s199, 4
          %s208 = int_to_ptr.vmem [resolvable:$true] %s207
          %213 = dma.hbm_to_vmem [thread:$0]  %s206, 2048, %s208, %s196, 128, 128, 8
        $region32: #{dgi_forward_and_loss.2} parent=27 // pred_fallthru
          _
      $region28: #{dgi_forward_and_loss.2} parent=5 // pred_fallthru
        _
      %p214 = scmp.le.s32.totalorder 1, %s17
      %p215 = scmp.lt.s32.totalorder %s17, 3
      %p216 = pnand %p214, %p215
      %p217 = pneg %p216
      // Predicated region
      $region33: #{dgi_forward_and_loss.2} parent=5 // pred_check
        _
      $region34: #{dgi_forward_and_loss.2} parent=5 // pred_check_branch
        %219 = sbr.rel (%p216) target = $region36
      $region35: #{dgi_forward_and_loss.2} parent=5 // pred_region
        %s220 = ssub.s32 %s17, 1
        %s221 = sand.u32 %s30, 1
        %s222 = scalar_lea.sflag [#allocation5], %s221
        %s223 = sand.u32 %s30, 1
        %s224 = smul.addr %s223, 128
        %s225 = scalar_lea.vmem [#allocation4], %s224
        // Predicated region
        $region37: #{dgi_forward_and_loss.2} parent=35 // pred_check
          %p226 = pneg %p43
        $region38: #{dgi_forward_and_loss.2} parent=35 // pred_check_branch
          %228 = sbr.rel (%p226) target = $region40
        $region39: #{dgi_forward_and_loss.2} parent=35 // pred_region
          %230 = dma.done %s222, 2048
        $region40: #{dgi_forward_and_loss.2} parent=35 // pred_fallthru
          _
        // Predicated region
        $region41: #{dgi_forward_and_loss.2} parent=35 // pred_check
          %p231 = pneg %p64
        $region42: #{dgi_forward_and_loss.2} parent=35 // pred_check_branch
          %233 = sbr.rel (%p231) target = $region44
        $region43: #{dgi_forward_and_loss.2} parent=35 // pred_region
          %235 = dma.done [#allocation7], 2048
        $region44: #{dgi_forward_and_loss.2} parent=35 // pred_fallthru
          _
        %s236 = sand.u32 %s30, 1
        %s237 = scalar_lea.sflag [#allocation5], %s236
        %s238 = sand.u32 %s30, 1
        %s239 = smul.addr %s238, 128
        %s240 = scalar_lea.vmem [#allocation4], %s239
        %p241 = pneg %p43
        %p242 = pneg %p40
        %p243 = pneg %p64
        %p244 = pneg %p61
        %p245 = pneg %p85
        %p246 = pneg %p82
        %p247 = pneg %p106
        %p248 = pneg %p103
        %p249 = pneg %p132
        %p250 = pneg %p129
        %s251 = smul.u32 16, %s22
        %p252 = scmp.lt.s32.totalorder %s251, 31
        %s253 = scalar_select %p252, %s251, 31
        %s254 = smul.addr %s253, 8
        %s255 = scalar_lea.vmem %s4, %s254
        %p256 = pneg %p153
        %p257 = pneg %p150
        %s258 = smul.u32 16, %s22
        %s259 = smul.u32 16, %s22
        %p260 = scmp.lt.s32.totalorder %s259, 31
        %s261 = scalar_select %p260, %s259, 31
        %s262 = smul.addr %s261, 8
        %s263 = scalar_lea.vmem %s4, %s262
        %s264 = smul.u32 16, %s22
        %p265 = scmp.eq.s32.totalorder %s22, 0
        // Predicated region
        $region45: #{dgi_forward_and_loss.2} parent=35 // pred_check
          %p266 = pneg %p265
        $region46: #{dgi_forward_and_loss.2} parent=35 // pred_check_branch
          %268 = sbr.rel (%p266) target = $region48
        $region47: #{dgi_forward_and_loss.2} parent=35 // pred_region
          %269 = vst [vmem:[#allocation2] sm:$0x1] 0.0
        $region48: #{dgi_forward_and_loss.2} parent=35 // pred_fallthru
          _
        %v270 = vld [vmem:[%s225] sm:$0xff]
        %v271 = vld [vmem:[%s225 + $0x8] sm:$0xff]
        %v272 = vld [vmem:[%s225 + $0x10] sm:$0xff]
        %v273 = vld [vmem:[%s225 + $0x18] sm:$0xff]
        %v274 = vld [vmem:[%s225 + $0x20] sm:$0xff]
        %v275 = vld [vmem:[%s225 + $0x28] sm:$0xff]
        %v276 = vld [vmem:[%s225 + $0x30] sm:$0xff]
        %v277 = vld [vmem:[%s225 + $0x38] sm:$0xff]
        %v278 = vld [vmem:[%s225 + $0x40] sm:$0xff]
        %v279 = vld [vmem:[%s225 + $0x48] sm:$0xff]
        %v280 = vld [vmem:[%s225 + $0x50] sm:$0xff]
        %v281 = vld [vmem:[%s225 + $0x58] sm:$0xff]
        %v282 = vld [vmem:[%s225 + $0x60] sm:$0xff]
        %v283 = vld [vmem:[%s225 + $0x68] sm:$0xff]
        %v284 = vld [vmem:[%s225 + $0x70] sm:$0xff]
        %v285 = vld [vmem:[%s225 + $0x78] sm:$0xff]
        %v286 = vld [vmem:[#allocation6] sm:$0xff]
        %v287 = vld [vmem:[#allocation6 + $0x8] sm:$0xff]
        %v288 = vld [vmem:[#allocation6 + $0x10] sm:$0xff]
        %v289 = vld [vmem:[#allocation6 + $0x18] sm:$0xff]
        %v290 = vld [vmem:[#allocation6 + $0x20] sm:$0xff]
        %v291 = vld [vmem:[#allocation6 + $0x28] sm:$0xff]
        %v292 = vld [vmem:[#allocation6 + $0x30] sm:$0xff]
        %v293 = vld [vmem:[#allocation6 + $0x38] sm:$0xff]
        %v294 = vld [vmem:[#allocation6 + $0x40] sm:$0xff]
        %v295 = vld [vmem:[#allocation6 + $0x48] sm:$0xff]
        %v296 = vld [vmem:[#allocation6 + $0x50] sm:$0xff]
        %v297 = vld [vmem:[#allocation6 + $0x58] sm:$0xff]
        %v298 = vld [vmem:[#allocation6 + $0x60] sm:$0xff]
        %v299 = vld [vmem:[#allocation6 + $0x68] sm:$0xff]
        %v300 = vld [vmem:[#allocation6 + $0x70] sm:$0xff]
        %v301 = vld [vmem:[#allocation6 + $0x78] sm:$0xff]
        %v302 = vld [vmem:[%s2] sm:$0x1]
        %v304 = vperm.slane %v302, 0
        %306 = vmatpush.msra.mxu0 %v301
        %307 = vmatpush.msra.mxu0 %v300
        %308 = vmatpush.msra.mxu0 %v299
        %309 = vmatpush.msra.mxu0 %v298
        %310 = vmatpush.msra.mxu0 %v297
        %311 = vmatpush.msra.mxu0 %v296
        %312 = vmatpush.msra.mxu0 %v295
        %313 = vmatpush.msra.mxu0 %v294
        %314 = vmatpush.msra.mxu0 %v293
        %315 = vmatpush.msra.mxu0 %v292
        %316 = vmatpush.msra.mxu0 %v291
        %317 = vmatpush.msra.mxu0 %v290
        %318 = vmatpush.msra.mxu0 %v289
        %319 = vmatpush.msra.mxu0 %v288
        %320 = vmatpush.msra.mxu0 %v287
        %321 = vmatpush.msra.mxu0 %v286
        %322 = vmatmul.f32.gmra.mxu0 %v270
        %v323 = vpop.f32.mrf.mxu0
        %v324 = vadd.f32 %v304, %v323
        %325 = vmatmul.f32.gmra.mxu0 %v271
        %v326 = vpop.f32.mrf.mxu0
        %v327 = vadd.f32 %v304, %v326
        %328 = vmatmul.f32.gmra.mxu0 %v272
        %v329 = vpop.f32.mrf.mxu0
        %v330 = vadd.f32 %v304, %v329
        %331 = vmatmul.f32.gmra.mxu0 %v273
        %v332 = vpop.f32.mrf.mxu0
        %v333 = vadd.f32 %v304, %v332
        %334 = vmatmul.f32.gmra.mxu0 %v274
        %v335 = vpop.f32.mrf.mxu0
        %v336 = vadd.f32 %v304, %v335
        %337 = vmatmul.f32.gmra.mxu0 %v275
        %v338 = vpop.f32.mrf.mxu0
        %v339 = vadd.f32 %v304, %v338
        %340 = vmatmul.f32.gmra.mxu0 %v276
        %v341 = vpop.f32.mrf.mxu0
        %v342 = vadd.f32 %v304, %v341
        %343 = vmatmul.f32.gmra.mxu0 %v277
        %v344 = vpop.f32.mrf.mxu0
        %v345 = vadd.f32 %v304, %v344
        %346 = vmatmul.f32.gmra.mxu0 %v278
        %v347 = vpop.f32.mrf.mxu0
        %v348 = vadd.f32 %v304, %v347
        %349 = vmatmul.f32.gmra.mxu0 %v279
        %v350 = vpop.f32.mrf.mxu0
        %v351 = vadd.f32 %v304, %v350
        %352 = vmatmul.f32.gmra.mxu0 %v280
        %v353 = vpop.f32.mrf.mxu0
        %v354 = vadd.f32 %v304, %v353
        %355 = vmatmul.f32.gmra.mxu0 %v281
        %v356 = vpop.f32.mrf.mxu0
        %v357 = vadd.f32 %v304, %v356
        %358 = vmatmul.f32.gmra.mxu0 %v282
        %v359 = vpop.f32.mrf.mxu0
        %v360 = vadd.f32 %v304, %v359
        %361 = vmatmul.f32.gmra.mxu0 %v283
        %v362 = vpop.f32.mrf.mxu0
        %v363 = vadd.f32 %v304, %v362
        %364 = vmatmul.f32.gmra.mxu0 %v284
        %v365 = vpop.f32.mrf.mxu0
        %v366 = vadd.f32 %v304, %v365
        %367 = vmatmul.f32.gmra.mxu0 %v285
        %v368 = vpop.f32.mrf.mxu0
        %v369 = vadd.f32 %v304, %v368
        %370 = vdwg.mxu0
        %s371 = sld [smem:[#allocation3]]
        %vm372 = vcmp.gt.f32.partialorder %v324, 0.0
        %vm373 = vcmp.gt.f32.partialorder %v327, 0.0
        %vm374 = vcmp.gt.f32.partialorder %v330, 0.0
        %vm375 = vcmp.gt.f32.partialorder %v333, 0.0
        %vm376 = vcmp.gt.f32.partialorder %v336, 0.0
        %vm377 = vcmp.gt.f32.partialorder %v339, 0.0
        %vm378 = vcmp.gt.f32.partialorder %v342, 0.0
        %vm379 = vcmp.gt.f32.partialorder %v345, 0.0
        %vm380 = vcmp.gt.f32.partialorder %v348, 0.0
        %vm381 = vcmp.gt.f32.partialorder %v351, 0.0
        %vm382 = vcmp.gt.f32.partialorder %v354, 0.0
        %vm383 = vcmp.gt.f32.partialorder %v357, 0.0
        %vm384 = vcmp.gt.f32.partialorder %v360, 0.0
        %vm385 = vcmp.gt.f32.partialorder %v363, 0.0
        %vm386 = vcmp.gt.f32.partialorder %v366, 0.0
        %vm387 = vcmp.gt.f32.partialorder %v369, 0.0
        %v388 = vstv %s371
        %v389 = vmul.f32 %v388, %v324
        %v390 = vmul.f32 %v388, %v327
        %v391 = vmul.f32 %v388, %v330
        %v392 = vmul.f32 %v388, %v333
        %v393 = vmul.f32 %v388, %v336
        %v394 = vmul.f32 %v388, %v339
        %v395 = vmul.f32 %v388, %v342
        %v396 = vmul.f32 %v388, %v345
        %v397 = vmul.f32 %v388, %v348
        %v398 = vmul.f32 %v388, %v351
        %v399 = vmul.f32 %v388, %v354
        %v400 = vmul.f32 %v388, %v357
        %v401 = vmul.f32 %v388, %v360
        %v402 = vmul.f32 %v388, %v363
        %v403 = vmul.f32 %v388, %v366
        %v404 = vmul.f32 %v388, %v369
        %v405 = vsel %vm372, %v324, %v389
        %v406 = vsel %vm373, %v327, %v390
        %v407 = vsel %vm374, %v330, %v391
        %v408 = vsel %vm375, %v333, %v392
        %v409 = vsel %vm376, %v336, %v393
        %v410 = vsel %vm377, %v339, %v394
        %v411 = vsel %vm378, %v342, %v395
        %v412 = vsel %vm379, %v345, %v396
        %v413 = vsel %vm380, %v348, %v397
        %v414 = vsel %vm381, %v351, %v398
        %v415 = vsel %vm382, %v354, %v399
        %v416 = vsel %vm383, %v357, %v400
        %v417 = vsel %vm384, %v360, %v401
        %v418 = vsel %vm385, %v363, %v402
        %v419 = vsel %vm386, %v366, %v403
        %v420 = vsel %vm387, %v369, %v404
        %421 = vst [vmem:[%s263] sm:$0xff] %v405
        %422 = vst [vmem:[%s263 + $0x8] sm:$0xff] %v406
        %423 = vst [vmem:[%s263 + $0x10] sm:$0xff] %v407
        %424 = vst [vmem:[%s263 + $0x18] sm:$0xff] %v408
        %425 = vst [vmem:[%s263 + $0x20] sm:$0xff] %v409
        %426 = vst [vmem:[%s263 + $0x28] sm:$0xff] %v410
        %427 = vst [vmem:[%s263 + $0x30] sm:$0xff] %v411
        %428 = vst [vmem:[%s263 + $0x38] sm:$0xff] %v412
        %429 = vst [vmem:[%s263 + $0x40] sm:$0xff] %v413
        %430 = vst [vmem:[%s263 + $0x48] sm:$0xff] %v414
        %431 = vst [vmem:[%s263 + $0x50] sm:$0xff] %v415
        %432 = vst [vmem:[%s263 + $0x58] sm:$0xff] %v416
        %433 = vst [vmem:[%s263 + $0x60] sm:$0xff] %v417
        %434 = vst [vmem:[%s263 + $0x68] sm:$0xff] %v418
        %435 = vst [vmem:[%s263 + $0x70] sm:$0xff] %v419
        %436 = vst [vmem:[%s263 + $0x78] sm:$0xff] %v420
        %v437 = vld [vmem:[#allocation2] sm:$0x1]
        %v438 = vadd.f32 %v405, %v406
        %v439 = vadd.f32 %v438, %v407
        %v440 = vadd.f32 %v439, %v408
        %v441 = vadd.f32 %v440, %v409
        %v442 = vadd.f32 %v441, %v410
        %v443 = vadd.f32 %v442, %v411
        %v444 = vadd.f32 %v443, %v412
        %v445 = vadd.f32 %v444, %v413
        %v446 = vadd.f32 %v445, %v414
        %v447 = vadd.f32 %v446, %v415
        %v448 = vadd.f32 %v447, %v416
        %v449 = vadd.f32 %v448, %v417
        %v450 = vadd.f32 %v449, %v418
        %v451 = vadd.f32 %v450, %v419
        %v452 = vadd.f32 %v451, %v420
        %v453 = vrot.slane %v452, 4
        %v454 = vadd.f32 %v452, %v453
        %v455 = vrot.slane %v454, 2
        %v456 = vadd.f32 %v454, %v455
        %v457 = vrot.slane %v456, 1
        %v458 = vadd.f32 %v456, %v457
        %v459 = vadd.f32 %v437, %v458
        %460 = vst [vmem:[#allocation2] sm:$0x1] %v459
        %p461 = scmp.eq.s32.totalorder %s22, 1
        // Predicated region
        $region49: #{dgi_forward_and_loss.2} parent=35 // pred_check
          %p462 = pneg %p461
        $region50: #{dgi_forward_and_loss.2} parent=35 // pred_check_branch
          %464 = sbr.rel (%p462) target = $region52
        $region51: #{dgi_forward_and_loss.2} parent=35 // pred_region
          %v465 = vld [vmem:[#allocation2] sm:$0x1]
          %v466 = vmul.f32 %v465, 0.00390625
          %v467 = vxor.u32 %v466, 2147483648
          %v468 = vmul.f32 %v467, 1.442695
          %v469 = vpow.pop %v468
          %v470 = vadd.f32 %v469, 1.0
          %v471 = vrcp.pop %v470
          %v472 = vmul.f32 %v470, %v471
          %v473 = vsub.f32 1.0, %v472
          %v474 = vmul.f32 %v471, %v473
          %v475 = vadd.f32 %v471, %v474
          %vm476 = vweird.f32 %v470
          %vm477 = vweird.f32 %v471
          %vm478 = vmor %vm476, %vm477
          %v479 = vsel %vm478, %v471, %v475
          %v480 = vand.u32 2147483647, %v470
          %vm481 = vcmp.eq.f32.partialorder %v480, 8.507059e+37
          %v482 = vand.u32 %v470, 2147483648
          %v483 = vor.u32 1.1754944e-38, %v482
          %v484 = vsel %vm481, %v483, %v479
          %v485 = vmul.f32 1.0, %v484
          %486 = vst [vmem:[%s5] sm:$0x1] %v485
        $region52: #{dgi_forward_and_loss.2} parent=35 // pred_fallthru
          _
        %s487 = smul.u32 16, %s22
        %p488 = scmp.lt.s32.totalorder %s487, 31
        %s489 = scalar_select %p488, %s487, 31
        %s490 = smul.addr %s489, 8
        %s491 = scalar_lea.vmem %s4, %s490
        // Predicated region
        $region53: #{dgi_forward_and_loss.2} parent=35 // pred_check
          %p492 = pneg %p129
        $region54: #{dgi_forward_and_loss.2} parent=35 // pred_check_branch
          %494 = sbr.rel (%p492) target = $region56
        $region55: #{dgi_forward_and_loss.2} parent=35 // pred_region
          %s495 = smul.u32 16, %s22
        $region56: #{dgi_forward_and_loss.2} parent=35 // pred_fallthru
          _
        // Predicated region
        $region57: #{dgi_forward_and_loss.2} parent=35 // pred_check
          %p496 = pneg %p150
        $region58: #{dgi_forward_and_loss.2} parent=35 // pred_check_branch
          %498 = sbr.rel (%p496) target = $region60
        $region59: #{dgi_forward_and_loss.2} parent=35 // pred_region
          _
        $region60: #{dgi_forward_and_loss.2} parent=35 // pred_fallthru
          _
        // Predicated region
        $region61: #{dgi_forward_and_loss.2} parent=35 // pred_check
          %p499 = pneg %p150
        $region62: #{dgi_forward_and_loss.2} parent=35 // pred_check_branch
          %501 = sbr.rel (%p499) target = $region64
        $region63: #{dgi_forward_and_loss.2} parent=35 // pred_region
          _
        $region64: #{dgi_forward_and_loss.2} parent=35 // pred_fallthru
          _
      $region36: #{dgi_forward_and_loss.2} parent=5 // pred_fallthru
        _
      %p502 = scmp.le.s32.totalorder 2, %s17
      // Predicated region
      $region65: #{dgi_forward_and_loss.2} parent=5 // pred_check
        %p503 = pneg %p502
      $region66: #{dgi_forward_and_loss.2} parent=5 // pred_check_branch
        %505 = sbr.rel (%p503) target = $region68
      $region67: #{dgi_forward_and_loss.2} parent=5 // pred_region
        %s506 = ssub.s32 %s17, 2
        // Predicated region
        $region69: #{dgi_forward_and_loss.2} parent=67 // pred_check
          %p507 = pneg %p135
        $region70: #{dgi_forward_and_loss.2} parent=67 // pred_check_branch
          %509 = sbr.rel (%p507) target = $region72
        $region71: #{dgi_forward_and_loss.2} parent=67 // pred_region
          %s510 = smul.u32 16, %s23
          %p511 = scmp.lt.s32.totalorder %s510, 31
          %s512 = scalar_select %p511, %s510, 31
          %s513 = smul.addr %s512, 8
          %s514 = scalar_lea.vmem %s4, %s513
        $region72: #{dgi_forward_and_loss.2} parent=67 // pred_fallthru
          _
      $region68: #{dgi_forward_and_loss.2} parent=5 // pred_fallthru
        _
    $region6: #{dgi_forward_and_loss.2} parent=1 // loop_footer
      %s21 = sadd.s32 1, %s17
    $region7: #{dgi_forward_and_loss.2} parent=1 // loop_footer_branch
      %16 = sbr.rel target = $region3
    $region8: #{dgi_forward_and_loss.2} parent=1 // loop_exit
      _
    %515 = vsyncpa [#allocation5], 1
    %s516 = scalar_lea.sflag [#allocation5], 1
    %517 = vsyncpa %s516, 1
    %518 = vsyncpa [#allocation7], 1

// kernel: dgi_forward_and_loss.3
$region0: #{dgi_forward_and_loss.3}
  #allocation0 [shape = 'u32[]', space=smem, size = 0x4, offset = 0x4, fixed_abs, tag = 'smem constant byte address 0x4 - core index']
  #allocation1 [shape = 'u32[72,128]{1,0:T(1,128)}', space=vmem, size = 0x9000, scoped, tag = 'internal scratch']
  #allocation2 [shape = 'f32[1,128]{1,0:T(1,128)}', space=vmem, size = 0x200, scoped, tag = 'scratch operand']
  #allocation3 [shape = 'f32[1,1]{1,0:T(1,128)}', space=vmem, size = 0x200, scoped, tag = 'scratch operand']
  %s0 = inlined_call_operand.vmem [shape: f32[256,128], index: 0, kind: input, shape index: {}]
  %s1 = inlined_call_operand.vmem [shape: f32[1,128], index: 1, kind: input, shape index: {}]
  %s2 = inlined_call_operand.hbm [shape: f32[128,128], index: 2, kind: input, shape index: {}]
  %s3 = inlined_call_operand.hbm [shape: f32[1,1], index: 3, kind: output, shape index: {}]
  %s4 = sld [smem:[#allocation0]]
  $region57: #{dgi_forward_and_loss.3} parent=0
    _
  %s6 = ssub.s32 1, %s4
  %s7 = scalar_select 0, %s6, %s4
  $region1: #{dgi_forward_and_loss.3} parent=0
    #allocation4 [shape = 'u8[65536]{0}', space=vmem, size = 0x10000, scoped, tag = 'input window, operand 2, single buffered']
    #allocation5 [shape = 's32[2]{0}', space=sflag, size = 0x8, scoped, tag = 'scoped memory for dgi_forward_and_loss.3']
    #allocation6 [shape = 's32[2]{0}', space=sflag, size = 0x8, scoped, tag = 'scoped memory for dgi_forward_and_loss.3']
    #allocation7 [shape = 'u8[512]{0}', space=vmem, size = 0x400, scoped, tag = 'output window, operand 0, single buffered']
    %8 = vsyncpa [#allocation5], 0
    %9 = vsyncpa [#allocation6], 0
    loop: start=0, step=1, limit=4
    $region2: #{dgi_forward_and_loss.3} parent=1 // loop_pre_header
      _
    $region3: #{dgi_forward_and_loss.3} parent=1 // loop_header
      %s11 = sphi 0, %s15
      %p12 = scmp.ge.s32.totalorder %s11, 4
      %s21 = sphi 0, %s23
      %s24 = sphi 0, %s21
      %s25 = sphi 0, %s24
      %s41 = sphi 0, %s25
      %s45 = sphi 0, %s45
      %s47 = sphi 0, %s45
      %s48 = sphi 0, %s47
      %s62 = sphi 0, %s48
      %s66 = sphi 0, %s66
      %s68 = sphi 0, %s66
      %s69 = sphi 0, %s68
      %s83 = sphi 0, %s69
      %s87 = sphi 0, %s87
      %s89 = sphi 0, %s87
      %s90 = sphi 0, %s89
      %s104 = sphi 0, %s90
    $region4: #{dgi_forward_and_loss.3} parent=1 // loop_header_branch
      %14 = sbr.rel (%p12) target = $region8
    $region5: #{dgi_forward_and_loss.3} parent=1 // loop_body
      %s16 = ssub.s32 %s11, 1
      %s17 = ssub.s32 %s11, 2
      %s18 = sadd.s32 %s11, 1
      %s19 = ssub.s32 %s11, %s18
      %p20 = scmp.eq.s32.totalorder %s19, 0
      %s22 = sadd.s32 %s21, 1
      %s23 = scalar_select %p20, %s21, %s22
      %p26 = pneg %p20
      %p27 = scmp.eq.s32.totalorder %s11, 1
      %p28 = por %p26, %p27
      %p29 = scmp.ne.s32.totalorder %s21, %s24
      %p30 = scmp.eq.s32.totalorder %s11, 0
      %p31 = por %p29, %p30
      %p32 = scmp.ne.s32.totalorder %s21, %s24
      %p33 = scmp.eq.s32.totalorder %s16, 1
      %p34 = por %p32, %p33
      %p35 = scmp.ne.s32.totalorder %s24, %s25
      %p36 = scmp.eq.s32.totalorder %s16, 0
      %p37 = por %p35, %p36
      %p38 = scmp.ne.s32.totalorder %s24, %s25
      %p39 = scmp.eq.s32.totalorder %s17, 1
      %p40 = por %p38, %p39
      %p42 = scmp.ne.s32.totalorder %s25, %s41
      %p43 = scmp.eq.s32.totalorder %s17, 0
      %p44 = por %p42, %p43
      %s46 = sadd.s32 %s45, 1
      %p49 = scmp.eq.s32.totalorder %s11, 1
      %p50 = scmp.ne.s32.totalorder %s45, %s47
      %p51 = scmp.eq.s32.totalorder %s11, 0
      %p52 = por %p50, %p51
      %p53 = scmp.ne.s32.totalorder %s45, %s47
      %p54 = scmp.eq.s32.totalorder %s16, 1
      %p55 = por %p53, %p54
      %p56 = scmp.ne.s32.totalorder %s47, %s48
      %p57 = scmp.eq.s32.totalorder %s16, 0
      %p58 = por %p56, %p57
      %p59 = scmp.ne.s32.totalorder %s47, %s48
      %p60 = scmp.eq.s32.totalorder %s17, 1
      %p61 = por %p59, %p60
      %p63 = scmp.ne.s32.totalorder %s48, %s62
      %p64 = scmp.eq.s32.totalorder %s17, 0
      %p65 = por %p63, %p64
      %s67 = sadd.s32 %s66, 1
      %p70 = scmp.eq.s32.totalorder %s11, 1
      %p71 = scmp.ne.s32.totalorder %s66, %s68
      %p72 = scmp.eq.s32.totalorder %s11, 0
      %p73 = por %p71, %p72
      %p74 = scmp.ne.s32.totalorder %s66, %s68
      %p75 = scmp.eq.s32.totalorder %s16, 1
      %p76 = por %p74, %p75
      %p77 = scmp.ne.s32.totalorder %s68, %s69
      %p78 = scmp.eq.s32.totalorder %s16, 0
      %p79 = por %p77, %p78
      %p80 = scmp.ne.s32.totalorder %s68, %s69
      %p81 = scmp.eq.s32.totalorder %s17, 1
      %p82 = por %p80, %p81
      %p84 = scmp.ne.s32.totalorder %s69, %s83
      %p85 = scmp.eq.s32.totalorder %s17, 0
      %p86 = por %p84, %p85
      %s88 = sadd.s32 %s87, 1
      %p91 = scmp.eq.s32.totalorder %s11, 1
      %p92 = scmp.ne.s32.totalorder %s87, %s89
      %p93 = scmp.eq.s32.totalorder %s11, 0
      %p94 = por %p92, %p93
      %p95 = scmp.ne.s32.totalorder %s87, %s89
      %p96 = scmp.eq.s32.totalorder %s16, 1
      %p97 = por %p95, %p96
      %p98 = scmp.ne.s32.totalorder %s89, %s90
      %p99 = scmp.eq.s32.totalorder %s16, 0
      %p100 = por %p98, %p99
      %p101 = scmp.ne.s32.totalorder %s89, %s90
      %p102 = scmp.eq.s32.totalorder %s17, 1
      %p103 = por %p101, %p102
      %p105 = scmp.ne.s32.totalorder %s90, %s104
      %p106 = scmp.eq.s32.totalorder %s17, 0
      %p107 = por %p105, %p106
      %p108 = scmp.le.s32.totalorder 1, %s11
      %p109 = scmp.lt.s32.totalorder %s11, 3
      %p110 = pnand %p108, %p109
      %p111 = pneg %p110
      // Predicated region
      $region9: #{dgi_forward_and_loss.3} parent=5 // pred_check
        _
      $region10: #{dgi_forward_and_loss.3} parent=5 // pred_check_branch
        %113 = sbr.rel (%p110) target = $region12
      $region11: #{dgi_forward_and_loss.3} parent=5 // pred_region
        %s114 = ssub.s32 %s11, 1
        // Predicated region
        $region13: #{dgi_forward_and_loss.3} parent=11 // pred_check
          %p115 = pneg %p58
        $region14: #{dgi_forward_and_loss.3} parent=11 // pred_check_branch
          %117 = sbr.rel (%p115) target = $region16
        $region15: #{dgi_forward_and_loss.3} parent=11 // pred_region
          _
        $region16: #{dgi_forward_and_loss.3} parent=11 // pred_fallthru
          _
        // Predicated region
        $region17: #{dgi_forward_and_loss.3} parent=11 // pred_check
          %p118 = pneg %p79
        $region18: #{dgi_forward_and_loss.3} parent=11 // pred_check_branch
          %120 = sbr.rel (%p118) target = $region20
        $region19: #{dgi_forward_and_loss.3} parent=11 // pred_region
          %122 = vsyncadd [#allocation5], 0
          %s123 = sshll.u32 %s2, 4
          %s124 = int_to_ptr.hbm [resolvable:$true] %s123
          %s125 = sshll.u32 [#allocation4], 4
          %s126 = int_to_ptr.vmem [resolvable:$true] %s125
          %131 = dma.hbm_to_vmem [thread:$0]  %s124, 2048, %s126, [#allocation5], 128, 128, 8
        $region20: #{dgi_forward_and_loss.3} parent=11 // pred_fallthru
          _
      $region12: #{dgi_forward_and_loss.3} parent=5 // pred_fallthru
        _
      %p132 = scmp.lt.s32.totalorder %s11, 2
      // Predicated region
      $region21: #{dgi_forward_and_loss.3} parent=5 // pred_check
        %p133 = pneg %p132
      $region22: #{dgi_forward_and_loss.3} parent=5 // pred_check_branch
        %135 = sbr.rel (%p133) target = $region24
      $region23: #{dgi_forward_and_loss.3} parent=5 // pred_region
        // Predicated region
        $region25: #{dgi_forward_and_loss.3} parent=23 // pred_check
          %p136 = pneg %p31
        $region26: #{dgi_forward_and_loss.3} parent=23 // pred_check_branch
          %138 = sbr.rel (%p136) target = $region28
        $region27: #{dgi_forward_and_loss.3} parent=23 // pred_region
          %s139 = smul.u32 16, %s11
          %p140 = scmp.lt.s32.totalorder %s139, 31
          %s141 = scalar_select %p140, %s139, 31
          %s142 = smul.addr %s141, 8
          %s143 = scalar_lea.vmem %s0, %s142
          %s144 = smul.u32 16, %s11
        $region28: #{dgi_forward_and_loss.3} parent=23 // pred_fallthru
          _
      $region24: #{dgi_forward_and_loss.3} parent=5 // pred_fallthru
        _
      %p145 = scmp.le.s32.totalorder 1, %s11
      %p146 = scmp.lt.s32.totalorder %s11, 3
      %p147 = pnand %p145, %p146
      %p148 = pneg %p147
      // Predicated region
      $region29: #{dgi_forward_and_loss.3} parent=5 // pred_check
        _
      $region30: #{dgi_forward_and_loss.3} parent=5 // pred_check_branch
        %150 = sbr.rel (%p147) target = $region32
      $region31: #{dgi_forward_and_loss.3} parent=5 // pred_region
        %s151 = ssub.s32 %s11, 1
        // Predicated region
        $region33: #{dgi_forward_and_loss.3} parent=31 // pred_check
          %p152 = pneg %p79
        $region34: #{dgi_forward_and_loss.3} parent=31 // pred_check_branch
          %154 = sbr.rel (%p152) target = $region36
        $region35: #{dgi_forward_and_loss.3} parent=31 // pred_region
          %156 = dma.done [#allocation5], 2048
        $region36: #{dgi_forward_and_loss.3} parent=31 // pred_fallthru
          _
        %s157 = smul.u32 16, %s16
        %p158 = scmp.lt.s32.totalorder %s157, 31
        %s159 = scalar_select %p158, %s157, 31
        %s160 = smul.addr %s159, 8
        %s161 = scalar_lea.vmem %s0, %s160
        %p162 = pneg %p37
        %p163 = pneg %p34
        %p164 = pneg %p58
        %p165 = pneg %p55
        %p166 = pneg %p79
        %p167 = pneg %p76
        %p168 = pneg %p100
        %p169 = pneg %p97
        %s170 = smul.u32 16, %s16
        %p171 = scmp.lt.s32.totalorder %s170, 31
        %s172 = scalar_select %p171, %s170, 31
        %s173 = smul.addr %s172, 8
        %s174 = scalar_lea.vmem %s0, %s173
        %s175 = smul.u32 16, %s16
        %p176 = scmp.eq.s32.totalorder %s16, 0
        // Predicated region
        $region37: #{dgi_forward_and_loss.3} parent=31 // pred_check
          %p177 = pneg %p176
        $region38: #{dgi_forward_and_loss.3} parent=31 // pred_check_branch
          %179 = sbr.rel (%p177) target = $region40
        $region39: #{dgi_forward_and_loss.3} parent=31 // pred_region
          %v180 = vld [vmem:[%s1] sm:$0x1]
          %v181 = vld [vmem:[#allocation4] sm:$0xff]
          %v182 = vld [vmem:[#allocation4 + $0x8] sm:$0xff]
          %v183 = vld [vmem:[#allocation4 + $0x10] sm:$0xff]
          %v184 = vld [vmem:[#allocation4 + $0x18] sm:$0xff]
          %v185 = vld [vmem:[#allocation4 + $0x20] sm:$0xff]
          %v186 = vld [vmem:[#allocation4 + $0x28] sm:$0xff]
          %v187 = vld [vmem:[#allocation4 + $0x30] sm:$0xff]
          %v188 = vld [vmem:[#allocation4 + $0x38] sm:$0xff]
          %v189 = vld [vmem:[#allocation4 + $0x40] sm:$0xff]
          %v190 = vld [vmem:[#allocation4 + $0x48] sm:$0xff]
          %v191 = vld [vmem:[#allocation4 + $0x50] sm:$0xff]
          %v192 = vld [vmem:[#allocation4 + $0x58] sm:$0xff]
          %v193 = vld [vmem:[#allocation4 + $0x60] sm:$0xff]
          %v194 = vld [vmem:[#allocation4 + $0x68] sm:$0xff]
          %v195 = vld [vmem:[#allocation4 + $0x70] sm:$0xff]
          %v196 = vld [vmem:[#allocation4 + $0x78] sm:$0xff]
          %197 = vmatpush.xpose.msra.mxu0 %v196
          %198 = vmatpush.xpose.msra.mxu0 %v195
          %199 = vmatpush.xpose.msra.mxu0 %v194
          %200 = vmatpush.xpose.msra.mxu0 %v193
          %201 = vmatpush.xpose.msra.mxu0 %v192
          %202 = vmatpush.xpose.msra.mxu0 %v191
          %203 = vmatpush.xpose.msra.mxu0 %v190
          %204 = vmatpush.xpose.msra.mxu0 %v189
          %205 = vmatpush.xpose.msra.mxu0 %v188
          %206 = vmatpush.xpose.msra.mxu0 %v187
          %207 = vmatpush.xpose.msra.mxu0 %v186
          %208 = vmatpush.xpose.msra.mxu0 %v185
          %209 = vmatpush.xpose.msra.mxu0 %v184
          %210 = vmatpush.xpose.msra.mxu0 %v183
          %211 = vmatpush.xpose.msra.mxu0 %v182
          %212 = vmatpush.xpose.msra.mxu0 %v181
          %213 = vmatmul.f32.gmra.mxu0 %v180
          %v214 = vpop.f32.mrf.mxu0
          %v215 = vadd.f32 0.0, %v214
          %216 = vdwg.mxu0
          %217 = vst [vmem:[#allocation2] sm:$0x1] %v215
          %vm218 = vcmask 0
          %219 = vst.msk [vmem:[#allocation3] sm:$0x1] %vm218, 0.0
        $region40: #{dgi_forward_and_loss.3} parent=31 // pred_fallthru
          _
        %v220 = vld [vmem:[%s174] sm:$0xff]
        %v221 = vld [vmem:[%s174 + $0x8] sm:$0xff]
        %v222 = vld [vmem:[%s174 + $0x10] sm:$0xff]
        %v223 = vld [vmem:[%s174 + $0x18] sm:$0xff]
        %v224 = vld [vmem:[%s174 + $0x20] sm:$0xff]
        %v225 = vld [vmem:[%s174 + $0x28] sm:$0xff]
        %v226 = vld [vmem:[%s174 + $0x30] sm:$0xff]
        %v227 = vld [vmem:[%s174 + $0x38] sm:$0xff]
        %v228 = vld [vmem:[%s174 + $0x40] sm:$0xff]
        %v229 = vld [vmem:[%s174 + $0x48] sm:$0xff]
        %v230 = vld [vmem:[%s174 + $0x50] sm:$0xff]
        %v231 = vld [vmem:[%s174 + $0x58] sm:$0xff]
        %v232 = vld [vmem:[%s174 + $0x60] sm:$0xff]
        %v233 = vld [vmem:[%s174 + $0x68] sm:$0xff]
        %v234 = vld [vmem:[%s174 + $0x70] sm:$0xff]
        %v235 = vld [vmem:[%s174 + $0x78] sm:$0xff]
        %v236 = vld [vmem:[#allocation2] sm:$0x1]
        %v238 = vperm.slane %v236, 0
        %v240 = vmul.f32 %v220, %v238
        %v241 = vmul.f32 %v221, %v238
        %v242 = vmul.f32 %v222, %v238
        %v243 = vmul.f32 %v223, %v238
        %v244 = vmul.f32 %v224, %v238
        %v245 = vmul.f32 %v225, %v238
        %v246 = vmul.f32 %v226, %v238
        %v247 = vmul.f32 %v227, %v238
        %v248 = vmul.f32 %v228, %v238
        %v249 = vmul.f32 %v229, %v238
        %v250 = vmul.f32 %v230, %v238
        %v251 = vmul.f32 %v231, %v238
        %v252 = vmul.f32 %v232, %v238
        %v253 = vmul.f32 %v233, %v238
        %v254 = vmul.f32 %v234, %v238
        %v255 = vmul.f32 %v235, %v238
        %256 = vadd.xlane.f32.xlu0 %v240
        %v257 = vpop.xlane.xlu0 %256
        %258 = vadd.xlane.f32.xlu0 %v241
        %v259 = vpop.xlane.xlu0 %258
        %260 = vadd.xlane.f32.xlu0 %v242
        %v261 = vpop.xlane.xlu0 %260
        %262 = vadd.xlane.f32.xlu0 %v243
        %v263 = vpop.xlane.xlu0 %262
        %264 = vadd.xlane.f32.xlu0 %v244
        %v265 = vpop.xlane.xlu0 %264
        %266 = vadd.xlane.f32.xlu0 %v245
        %v267 = vpop.xlane.xlu0 %266
        %268 = vadd.xlane.f32.xlu0 %v246
        %v269 = vpop.xlane.xlu0 %268
        %270 = vadd.xlane.f32.xlu0 %v247
        %v271 = vpop.xlane.xlu0 %270
        %272 = vadd.xlane.f32.xlu0 %v248
        %v273 = vpop.xlane.xlu0 %272
        %274 = vadd.xlane.f32.xlu0 %v249
        %v275 = vpop.xlane.xlu0 %274
        %276 = vadd.xlane.f32.xlu0 %v250
        %v277 = vpop.xlane.xlu0 %276
        %278 = vadd.xlane.f32.xlu0 %v251
        %v279 = vpop.xlane.xlu0 %278
        %280 = vadd.xlane.f32.xlu0 %v252
        %v281 = vpop.xlane.xlu0 %280
        %282 = vadd.xlane.f32.xlu0 %v253
        %v283 = vpop.xlane.xlu0 %282
        %284 = vadd.xlane.f32.xlu0 %v254
        %v285 = vpop.xlane.xlu0 %284
        %286 = vadd.xlane.f32.xlu0 %v255
        %v287 = vpop.xlane.xlu0 %286
        %v288 = vand.u32 2147483647, %v257
        %v289 = vand.u32 2147483647, %v259
        %v290 = vand.u32 2147483647, %v261
        %v291 = vand.u32 2147483647, %v263
        %v292 = vand.u32 2147483647, %v265
        %v293 = vand.u32 2147483647, %v267
        %v294 = vand.u32 2147483647, %v269
        %v295 = vand.u32 2147483647, %v271
        %v296 = vand.u32 2147483647, %v273
        %v297 = vand.u32 2147483647, %v275
        %v298 = vand.u32 2147483647, %v277
        %v299 = vand.u32 2147483647, %v279
        %v300 = vand.u32 2147483647, %v281
        %v301 = vand.u32 2147483647, %v283
        %v302 = vand.u32 2147483647, %v285
        %v303 = vand.u32 2147483647, %v287
        %v304 = vsub.f32 0.0, %v288
        %v305 = vsub.f32 0.0, %v289
        %v306 = vsub.f32 0.0, %v290
        %v307 = vsub.f32 0.0, %v291
        %v308 = vsub.f32 0.0, %v292
        %v309 = vsub.f32 0.0, %v293
        %v310 = vsub.f32 0.0, %v294
        %v311 = vsub.f32 0.0, %v295
        %v312 = vsub.f32 0.0, %v296
        %v313 = vsub.f32 0.0, %v297
        %v314 = vsub.f32 0.0, %v298
        %v315 = vsub.f32 0.0, %v299
        %v316 = vsub.f32 0.0, %v300
        %v317 = vsub.f32 0.0, %v301
        %v318 = vsub.f32 0.0, %v302
        %v319 = vsub.f32 0.0, %v303
        %v320 = vmul.f32 %v304, 1.442695
        %v321 = vpow.pop %v320
        %v322 = vmul.f32 %v305, 1.442695
        %v323 = vpow.pop %v322
        %v324 = vmul.f32 %v306, 1.442695
        %v325 = vpow.pop %v324
        %v326 = vmul.f32 %v307, 1.442695
        %v327 = vpow.pop %v326
        %v328 = vmul.f32 %v308, 1.442695
        %v329 = vpow.pop %v328
        %v330 = vmul.f32 %v309, 1.442695
        %v331 = vpow.pop %v330
        %v332 = vmul.f32 %v310, 1.442695
        %v333 = vpow.pop %v332
        %v334 = vmul.f32 %v311, 1.442695
        %v335 = vpow.pop %v334
        %v336 = vmul.f32 %v312, 1.442695
        %v337 = vpow.pop %v336
        %v338 = vmul.f32 %v313, 1.442695
        %v339 = vpow.pop %v338
        %v340 = vmul.f32 %v314, 1.442695
        %v341 = vpow.pop %v340
        %v342 = vmul.f32 %v315, 1.442695
        %v343 = vpow.pop %v342
        %v344 = vmul.f32 %v316, 1.442695
        %v345 = vpow.pop %v344
        %v346 = vmul.f32 %v317, 1.442695
        %v347 = vpow.pop %v346
        %v348 = vmul.f32 %v318, 1.442695
        %v349 = vpow.pop %v348
        %v350 = vmul.f32 %v319, 1.442695
        %v351 = vpow.pop %v350
        %v352 = vadd.f32 %v321, 1.0
        %v353 = vlog2.pop %v352
        %v354 = vmul.f32 %v353, 0.6931472
        %v355 = vmul.f32 -0.5, %v321
        %v356 = vadd.f32 %v355, 1.0
        %v357 = vmul.f32 %v356, %v321
        %v358 = vand.u32 2147483647, %v321
        %vm359 = vcmp.lt.f32.partialorder %v358, 0.0004427343
        %v360 = vsel %vm359, %v357, %v354
        %v361 = vadd.f32 %v323, 1.0
        %v362 = vlog2.pop %v361
        %v363 = vmul.f32 %v362, 0.6931472
        %v364 = vmul.f32 -0.5, %v323
        %v365 = vadd.f32 %v364, 1.0
        %v366 = vmul.f32 %v365, %v323
        %v367 = vand.u32 2147483647, %v323
        %vm368 = vcmp.lt.f32.partialorder %v367, 0.0004427343
        %v369 = vsel %vm368, %v366, %v363
        %v370 = vadd.f32 %v325, 1.0
        %v371 = vlog2.pop %v370
        %v372 = vmul.f32 %v371, 0.6931472
        %v373 = vmul.f32 -0.5, %v325
        %v374 = vadd.f32 %v373, 1.0
        %v375 = vmul.f32 %v374, %v325
        %v376 = vand.u32 2147483647, %v325
        %vm377 = vcmp.lt.f32.partialorder %v376, 0.0004427343
        %v378 = vsel %vm377, %v375, %v372
        %v379 = vadd.f32 %v327, 1.0
        %v380 = vlog2.pop %v379
        %v381 = vmul.f32 %v380, 0.6931472
        %v382 = vmul.f32 -0.5, %v327
        %v383 = vadd.f32 %v382, 1.0
        %v384 = vmul.f32 %v383, %v327
        %v385 = vand.u32 2147483647, %v327
        %vm386 = vcmp.lt.f32.partialorder %v385, 0.0004427343
        %v387 = vsel %vm386, %v384, %v381
        %v388 = vadd.f32 %v329, 1.0
        %v389 = vlog2.pop %v388
        %v390 = vmul.f32 %v389, 0.6931472
        %v391 = vmul.f32 -0.5, %v329
        %v392 = vadd.f32 %v391, 1.0
        %v393 = vmul.f32 %v392, %v329
        %v394 = vand.u32 2147483647, %v329
        %vm395 = vcmp.lt.f32.partialorder %v394, 0.0004427343
        %v396 = vsel %vm395, %v393, %v390
        %v397 = vadd.f32 %v331, 1.0
        %v398 = vlog2.pop %v397
        %v399 = vmul.f32 %v398, 0.6931472
        %v400 = vmul.f32 -0.5, %v331
        %v401 = vadd.f32 %v400, 1.0
        %v402 = vmul.f32 %v401, %v331
        %v403 = vand.u32 2147483647, %v331
        %vm404 = vcmp.lt.f32.partialorder %v403, 0.0004427343
        %v405 = vsel %vm404, %v402, %v399
        %v406 = vadd.f32 %v333, 1.0
        %v407 = vlog2.pop %v406
        %v408 = vmul.f32 %v407, 0.6931472
        %v409 = vmul.f32 -0.5, %v333
        %v410 = vadd.f32 %v409, 1.0
        %v411 = vmul.f32 %v410, %v333
        %v412 = vand.u32 2147483647, %v333
        %vm413 = vcmp.lt.f32.partialorder %v412, 0.0004427343
        %v414 = vsel %vm413, %v411, %v408
        %v415 = vadd.f32 %v335, 1.0
        %v416 = vlog2.pop %v415
        %v417 = vmul.f32 %v416, 0.6931472
        %v418 = vmul.f32 -0.5, %v335
        %v419 = vadd.f32 %v418, 1.0
        %v420 = vmul.f32 %v419, %v335
        %v421 = vand.u32 2147483647, %v335
        %vm422 = vcmp.lt.f32.partialorder %v421, 0.0004427343
        %v423 = vsel %vm422, %v420, %v417
        %v424 = vadd.f32 %v337, 1.0
        %v425 = vlog2.pop %v424
        %v426 = vmul.f32 %v425, 0.6931472
        %v427 = vmul.f32 -0.5, %v337
        %v428 = vadd.f32 %v427, 1.0
        %v429 = vmul.f32 %v428, %v337
        %v430 = vand.u32 2147483647, %v337
        %vm431 = vcmp.lt.f32.partialorder %v430, 0.0004427343
        %v432 = vsel %vm431, %v429, %v426
        %v433 = vadd.f32 %v339, 1.0
        %v434 = vlog2.pop %v433
        %v435 = vmul.f32 %v434, 0.6931472
        %v436 = vmul.f32 -0.5, %v339
        %v437 = vadd.f32 %v436, 1.0
        %v438 = vmul.f32 %v437, %v339
        %v439 = vand.u32 2147483647, %v339
        %vm440 = vcmp.lt.f32.partialorder %v439, 0.0004427343
        %v441 = vsel %vm440, %v438, %v435
        %v442 = vadd.f32 %v341, 1.0
        %v443 = vlog2.pop %v442
        %v444 = vmul.f32 %v443, 0.6931472
        %v445 = vmul.f32 -0.5, %v341
        %v446 = vadd.f32 %v445, 1.0
        %v447 = vmul.f32 %v446, %v341
        %v448 = vand.u32 2147483647, %v341
        %vm449 = vcmp.lt.f32.partialorder %v448, 0.0004427343
        %v450 = vsel %vm449, %v447, %v444
        %v451 = vadd.f32 %v343, 1.0
        %v452 = vlog2.pop %v451
        %v453 = vmul.f32 %v452, 0.6931472
        %v454 = vmul.f32 -0.5, %v343
        %v455 = vadd.f32 %v454, 1.0
        %v456 = vmul.f32 %v455, %v343
        %v457 = vand.u32 2147483647, %v343
        %vm458 = vcmp.lt.f32.partialorder %v457, 0.0004427343
        %v459 = vsel %vm458, %v456, %v453
        %v460 = vadd.f32 %v345, 1.0
        %v461 = vlog2.pop %v460
        %v462 = vmul.f32 %v461, 0.6931472
        %v463 = vmul.f32 -0.5, %v345
        %v464 = vadd.f32 %v463, 1.0
        %v465 = vmul.f32 %v464, %v345
        %v466 = vand.u32 2147483647, %v345
        %vm467 = vcmp.lt.f32.partialorder %v466, 0.0004427343
        %v468 = vsel %vm467, %v465, %v462
        %v469 = vadd.f32 %v347, 1.0
        %v470 = vlog2.pop %v469
        %v471 = vmul.f32 %v470, 0.6931472
        %v472 = vmul.f32 -0.5, %v347
        %v473 = vadd.f32 %v472, 1.0
        %v474 = vmul.f32 %v473, %v347
        %v475 = vand.u32 2147483647, %v347
        %vm476 = vcmp.lt.f32.partialorder %v475, 0.0004427343
        %v477 = vsel %vm476, %v474, %v471
        %v478 = vadd.f32 %v349, 1.0
        %v479 = vlog2.pop %v478
        %v480 = vmul.f32 %v479, 0.6931472
        %v481 = vmul.f32 -0.5, %v349
        %v482 = vadd.f32 %v481, 1.0
        %v483 = vmul.f32 %v482, %v349
        %v484 = vand.u32 2147483647, %v349
        %vm485 = vcmp.lt.f32.partialorder %v484, 0.0004427343
        %v486 = vsel %vm485, %v483, %v480
        %v487 = vadd.f32 %v351, 1.0
        %v488 = vlog2.pop %v487
        %v489 = vmul.f32 %v488, 0.6931472
        %v490 = vmul.f32 -0.5, %v351
        %v491 = vadd.f32 %v490, 1.0
        %v492 = vmul.f32 %v491, %v351
        %v493 = vand.u32 2147483647, %v351
        %vm494 = vcmp.lt.f32.partialorder %v493, 0.0004427343
        %v495 = vsel %vm494, %v492, %v489
        %v496 = vmul.f32 %v360, 2.0
        %v497 = vmul.f32 %v369, 2.0
        %v498 = vmul.f32 %v378, 2.0
        %v499 = vmul.f32 %v387, 2.0
        %v500 = vmul.f32 %v396, 2.0
        %v501 = vmul.f32 %v405, 2.0
        %v502 = vmul.f32 %v414, 2.0
        %v503 = vmul.f32 %v423, 2.0
        %v504 = vmul.f32 %v432, 2.0
        %v505 = vmul.f32 %v441, 2.0
        %v506 = vmul.f32 %v450, 2.0
        %v507 = vmul.f32 %v459, 2.0
        %v508 = vmul.f32 %v468, 2.0
        %v509 = vmul.f32 %v477, 2.0
        %v510 = vmul.f32 %v486, 2.0
        %v511 = vmul.f32 %v495, 2.0
        %v512 = vadd.f32 %v288, %v496
        %v513 = vadd.f32 %v289, %v497
        %v514 = vadd.f32 %v290, %v498
        %v515 = vadd.f32 %v291, %v499
        %v516 = vadd.f32 %v292, %v500
        %v517 = vadd.f32 %v293, %v501
        %v518 = vadd.f32 %v294, %v502
        %v519 = vadd.f32 %v295, %v503
        %v520 = vadd.f32 %v296, %v504
        %v521 = vadd.f32 %v297, %v505
        %v522 = vadd.f32 %v298, %v506
        %v523 = vadd.f32 %v299, %v507
        %v524 = vadd.f32 %v300, %v508
        %v525 = vadd.f32 %v301, %v509
        %v526 = vadd.f32 %v302, %v510
        %v527 = vadd.f32 %v303, %v511
        %v528 = vld [vmem:[#allocation3] sm:$0x1]
        %v529 = vadd.f32 %v512, %v513
        %v530 = vadd.f32 %v529, %v514
        %v531 = vadd.f32 %v530, %v515
        %v532 = vadd.f32 %v531, %v516
        %v533 = vadd.f32 %v532, %v517
        %v534 = vadd.f32 %v533, %v518
        %v535 = vadd.f32 %v534, %v519
        %v536 = vadd.f32 %v535, %v520
        %v537 = vadd.f32 %v536, %v521
        %v538 = vadd.f32 %v537, %v522
        %v539 = vadd.f32 %v538, %v523
        %v540 = vadd.f32 %v539, %v524
        %v541 = vadd.f32 %v540, %v525
        %v542 = vadd.f32 %v541, %v526
        %v543 = vadd.f32 %v542, %v527
        %v544 = vrot.slane %v543, 4
        %v545 = vadd.f32 %v543, %v544
        %v546 = vrot.slane %v545, 2
        %v547 = vadd.f32 %v545, %v546
        %v548 = vrot.slane %v547, 1
        %v549 = vadd.f32 %v547, %v548
        %v550 = vadd.f32 %v528, %v549
        %vm551 = vcmask 0
        %552 = vst.msk [vmem:[#allocation3] sm:$0x1] %vm551, %v550
        %p553 = scmp.eq.s32.totalorder %s16, 1
        // Predicated region
        $region41: #{dgi_forward_and_loss.3} parent=31 // pred_check
          %p554 = pneg %p553
        $region42: #{dgi_forward_and_loss.3} parent=31 // pred_check_branch
          %556 = sbr.rel (%p554) target = $region44
        $region43: #{dgi_forward_and_loss.3} parent=31 // pred_region
          %v557 = vld [vmem:[#allocation3] sm:$0x1]
          %v558 = vmul.f32 %v557, 0.00390625
          %559 = vst.msk [vmem:[#allocation7] sm:$0x1] %vm551, %v558
        $region44: #{dgi_forward_and_loss.3} parent=31 // pred_fallthru
          _
        // Predicated region
        $region45: #{dgi_forward_and_loss.3} parent=31 // pred_check
          %p560 = pneg %p97
        $region46: #{dgi_forward_and_loss.3} parent=31 // pred_check_branch
          %562 = sbr.rel (%p560) target = $region48
        $region47: #{dgi_forward_and_loss.3} parent=31 // pred_region
          %564 = vsyncadd [#allocation6], 0
          %s566 = sshll.u32 [#allocation7], 4
          %s567 = int_to_ptr.vmem [resolvable:$true] %s566
          %s568 = sshll.u32 %s3, 4
          %s569 = int_to_ptr.hbm [resolvable:$true] %s568
          %571 = dma.vmem_to_hbm [thread:$0]  %s567, 16, %s569, [#allocation6]
        $region48: #{dgi_forward_and_loss.3} parent=31 // pred_fallthru
          _
        // Predicated region
        $region49: #{dgi_forward_and_loss.3} parent=31 // pred_check
          %p572 = pneg %p97
        $region50: #{dgi_forward_and_loss.3} parent=31 // pred_check_branch
          %574 = sbr.rel (%p572) target = $region52
        $region51: #{dgi_forward_and_loss.3} parent=31 // pred_region
          %576 = dma.done [#allocation6], 16
        $region52: #{dgi_forward_and_loss.3} parent=31 // pred_fallthru
          _
      $region32: #{dgi_forward_and_loss.3} parent=5 // pred_fallthru
        _
      %p577 = scmp.le.s32.totalorder 2, %s11
      // Predicated region
      $region53: #{dgi_forward_and_loss.3} parent=5 // pred_check
        %p578 = pneg %p577
      $region54: #{dgi_forward_and_loss.3} parent=5 // pred_check_branch
        %580 = sbr.rel (%p578) target = $region56
      $region55: #{dgi_forward_and_loss.3} parent=5 // pred_region
        %s581 = ssub.s32 %s11, 2
      $region56: #{dgi_forward_and_loss.3} parent=5 // pred_fallthru
        _
    $region6: #{dgi_forward_and_loss.3} parent=1 // loop_footer
      %s15 = sadd.s32 1, %s11
    $region7: #{dgi_forward_and_loss.3} parent=1 // loop_footer_branch
      %10 = sbr.rel target = $region3
    $region8: #{dgi_forward_and_loss.3} parent=1 // loop_exit
      _
    %582 = vsyncpa [#allocation5], 1
    %s583 = scalar_lea.sflag [#allocation5], 1
    %584 = vsyncpa %s583, 1
    %585 = vsyncpa [#allocation6], 1
    %s586 = scalar_lea.sflag [#allocation6], 1
    %587 = vsyncpa %s586, 1

</llo_original>
